<compile_context>
chip_gen: v6e
topology: v6e:2x2x1
jax: 0.10.0
libtpu: 0.0.40
codegen_flags: <defaults>
</compile_context>

<pallas_src>
import functools

import jax
import jax.numpy as jnp
from jax import lax
from jax.experimental import pallas as pl
from jax.experimental.pallas import tpu as pltpu


def _round_up(x, m):
    return (x + m - 1) // m * m


def _pad_gate_cols(w, h, hp):
    """(..., 4h) -> (..., 4hp): zero-pad each of the 4 gate blocks to width hp."""
    if h == hp:
        return w
    pads = [(0, 0)] * (w.ndim - 1) + [(0, hp - h)]
    parts = [jnp.pad(w[..., k * h:(k + 1) * h], pads) for k in range(4)]
    return jnp.concatenate(parts, axis=-1)


def _lstm_kernel(x_ref, wih_ref, whh_ref, b_ref, wp_ref, bp_ref, out_ref,
                 h_sc, c_sc, g_sc, *, seq_len, chunk_len, batch_tile, hidden_p):
    """One grid step == one (batch_tile, time_chunk) block.

    x_ref   : (1, TC*TB, E) bf16  embedded tokens for this chunk (time-major rows)
    wih_ref : (E, 4Hp)      bf16  W_ih^T  (gate order i,f,g,o; per-gate zero-padded)
    whh_ref : (Hp, 4Hp)     bf16  W_hh^T
    b_ref   : (1, 4Hp)      f32   b_ih + b_hh
    wp_ref  : (Hp, Pp)      bf16  predictor weight^T
    bp_ref  : (1, Pp)       f32   predictor bias
    out_ref : (TB, Pp)      f32   predictions (written on last chunk)
    h_sc/c_sc : (TB, Hp) f32 VMEM scratch carrying LSTM state across chunks
    g_sc    : (TC*TB, 4Hp) f32 VMEM scratch holding the hoisted input projection
    """
    Hp = hidden_p
    TB = batch_tile
    TC = chunk_len
    chunk = pl.program_id(1)
    n_chunks = pl.num_programs(1)

    @pl.when(chunk == 0)
    def _():
        h_sc[...] = jnp.zeros_like(h_sc)
        c_sc[...] = jnp.zeros_like(c_sc)

    # ---- Phase 1 (no sequential dependency): input projection for the whole
    # chunk as one large MXU matmul with M = TC*TB.
    xg = jnp.dot(x_ref[0], wih_ref[...], preferred_element_type=jnp.float32)
    g_sc[...] = xg + b_ref[...]                                  # (TC*TB, 4Hp)

    # ---- Phase 2: serial recurrence over the valid timesteps of this chunk.
    valid = jnp.minimum(TC, seq_len - chunk * TC)

    def step(t, carry):
        h, c = carry
        row = pl.multiple_of(t * TB, TB)
        gates = g_sc[pl.ds(row, TB), :] + jnp.dot(
            h.astype(jnp.bfloat16), whh_ref[...],
            preferred_element_type=jnp.float32)                  # (TB, 4Hp) f32
        # Hp is a multiple of 128 -> every gate slice is lane-aligned.
        i_g = jax.nn.sigmoid(gates[:, 0 * Hp:1 * Hp])
        f_g = jax.nn.sigmoid(gates[:, 1 * Hp:2 * Hp])
        g_g = jnp.tanh(gates[:, 2 * Hp:3 * Hp])
        o_g = jax.nn.sigmoid(gates[:, 3 * Hp:4 * Hp])
        c_new = f_g * c + i_g * g_g
        h_new = o_g * jnp.tanh(c_new)
        return h_new, c_new

    h, c = lax.fori_loop(0, valid, step, (h_sc[...], c_sc[...]))
    h_sc[...] = h
    c_sc[...] = c

    # ---- Final chunk: predictor Linear on the last hidden state (lane-dense out).
    @pl.when(chunk == n_chunks - 1)
    def _():
        preds = jnp.dot(h.astype(jnp.bfloat16), wp_ref[...],
                        preferred_element_type=jnp.float32) + bp_ref[...]
        out_ref[...] = preds.astype(out_ref.dtype)


def simple_bilstm_forward(seq, params):
    """seq: (seq_len, batch) int32. Returns (batch, pred_num) f32."""
    emb = params["embedding"]          # (vocab, E)
    w_ih_t = params["w_ih_t"]          # (E, 4H)
    w_hh_t = params["w_hh_t"]          # (H, 4H)
    b = params["b"]                    # (1, 4H)
    w_p_t = params["w_p_t"]            # (H, P)
    b_p = params["b_p"]                # (1, P)

    T, B = seq.shape
    E = emb.shape[1]
    H = w_hh_t.shape[0]
    P = w_p_t.shape[1]

    # ---- padded, hardware-aligned geometry ----------------------------------
    Hp = _round_up(H, 128)             # lane-aligned gate slices
    Pp = _round_up(P, 128)             # lane-dense output store
    Bp = _round_up(B, 8)               # sublane-aligned batch
    TB = min(Bp, 128)                  # batch tile ("parallel" axis for megacore)
    Bp = _round_up(Bp, TB)
    n_btiles = Bp // TB

    # Time chunk: amortize per-grid-step overhead; keep the per-chunk gate
    # scratch (TC*TB, 4Hp) f32 around <= 4 MiB.
    g_row_bytes = TB * 4 * Hp * 4
    TC = int(min(T, max(1, (4 << 20) // g_row_bytes), 128))
    n_chunks = pl.cdiv(T, TC)
    T_pad = n_chunks * TC

    # ---- glue in plain JAX: embedding gather + dropout(identity) ------------
    x = jnp.take(emb, seq, axis=0)                               # (T, B, E) f32
    x = jnp.pad(x, ((0, T_pad - T), (0, Bp - B), (0, 0)))
    # Flatten to (n_btiles, T_pad*TB, E): rows of a chunk are [t0*TB.. , ...],
    # so the kernel never has to reshape and the per-chunk matmul has M = TC*TB.
    x = x.reshape(T_pad, n_btiles, TB, E).transpose(1, 0, 2, 3)
    x = x.reshape(n_btiles, T_pad * TB, E).astype(jnp.bfloat16)

    # ---- weights: per-gate zero-pad H->Hp, cast MXU operands to bf16 --------
    wih_p = _pad_gate_cols(w_ih_t, H, Hp).astype(jnp.bfloat16)               # (E, 4Hp)
    whh_p = _pad_gate_cols(w_hh_t, H, Hp)
    whh_p = jnp.pad(whh_p, ((0, Hp - H), (0, 0))).astype(jnp.bfloat16)       # (Hp, 4Hp)
    b_pad = _pad_gate_cols(b, H, Hp).astype(jnp.float32)                     # (1, 4Hp)
    wp_p = jnp.pad(w_p_t, ((0, Hp - H), (0, Pp - P))).astype(jnp.bfloat16)   # (Hp, Pp)
    bp_pad = jnp.pad(b_p, ((0, 0), (0, Pp - P))).astype(jnp.float32)         # (1, Pp)

    kernel = functools.partial(_lstm_kernel, seq_len=T, chunk_len=TC,
                               batch_tile=TB, hidden_p=Hp)

    grid_spec = pltpu.PrefetchScalarGridSpec(
        num_scalar_prefetch=0,
        grid=(n_btiles, n_chunks),
        in_specs=[
            pl.BlockSpec((1, TC * TB, E), lambda bi, ti: (bi, ti, 0)),
            pl.BlockSpec((E, 4 * Hp), lambda bi, ti: (0, 0)),
            pl.BlockSpec((Hp, 4 * Hp), lambda bi, ti: (0, 0)),
            pl.BlockSpec((1, 4 * Hp), lambda bi, ti: (0, 0)),
            pl.BlockSpec((Hp, Pp), lambda bi, ti: (0, 0)),
            pl.BlockSpec((1, Pp), lambda bi, ti: (0, 0)),
        ],
        out_specs=pl.BlockSpec((TB, Pp), lambda bi, ti: (bi, 0)),
        scratch_shapes=[
            pltpu.VMEM((TB, Hp), jnp.float32),          # h
            pltpu.VMEM((TB, Hp), jnp.float32),          # c
            pltpu.VMEM((TC * TB, 4 * Hp), jnp.float32),  # hoisted input projection
        ],
    )

    # Explicit VMEM budget (double-buffered x + weights + scratch), clamped
    # under v7x's 64 MiB physical VMEM.
    est = (2 * TC * TB * E * 2
           + 2 * (E * 4 * Hp * 2 + Hp * 4 * Hp * 2 + 4 * Hp * 4 + Hp * Pp * 2 + Pp * 4)
           + 2 * TB * Pp * 4
           + TC * TB * 4 * Hp * 4 + 2 * TB * Hp * 4)
    vmem_limit = int(min(max(2 * est, 16 << 20), 60 << 20))

    out = pl.pallas_call(
        kernel,
        out_shape=jax.ShapeDtypeStruct((Bp, Pp), jnp.float32),
        grid_spec=grid_spec,
        compiler_params=pltpu.CompilerParams(
            dimension_semantics=("parallel", "arbitrary"),  # batch || , time serial
            vmem_limit_bytes=vmem_limit),
    )(x, wih_p, whh_p, b_pad, wp_p, bp_pad)

    return out[:B, :P]


def init_params(key, vocab_size, emb_dim, hidden_dim, pred_num):
    ks = jax.random.split(key, 7)
    scale = 0.1
    emb = jax.random.normal(ks[0], (vocab_size, emb_dim), jnp.float32) * scale
    w_ih = jax.random.normal(ks[1], (4 * hidden_dim, emb_dim), jnp.float32) * scale
    w_hh = jax.random.normal(ks[2], (4 * hidden_dim, hidden_dim), jnp.float32) * scale
    b_ih = jax.random.normal(ks[3], (4 * hidden_dim,), jnp.float32) * scale
    b_hh = jax.random.normal(ks[4], (4 * hidden_dim,), jnp.float32) * scale
    w_p = jax.random.normal(ks[5], (pred_num, hidden_dim), jnp.float32) * scale
    b_p = jax.random.normal(ks[6], (pred_num,), jnp.float32) * scale
    return {
        "embedding": emb,
        "w_ih_t": w_ih.T,                       # (E, 4H)
        "w_hh_t": w_hh.T,                       # (H, 4H)
        "b": (b_ih + b_hh)[None, :],            # (1, 4H)
        "w_p_t": w_p.T,                         # (H, P)
        "b_p": b_p[None, :],                    # (1, P)
    }


def reference_forward(seq, params):
    """Pure-JAX reference mirroring the kernel's numerics
    (bf16 MXU operands, f32 state / accumulation / gate nonlinearities)."""
    x = jnp.take(params["embedding"], seq, axis=0).astype(jnp.bfloat16)  # (T,B,E)
    w_ih = params["w_ih_t"].astype(jnp.bfloat16)
    w_hh = params["w_hh_t"].astype(jnp.bfloat16)
    w_p = params["w_p_t"].astype(jnp.bfloat16)
    b = params["b"].astype(jnp.float32)
    b_p = params["b_p"].astype(jnp.float32)
    H = params["w_hh_t"].shape[0]
    B = seq.shape[1]
    h = jnp.zeros((B, H), jnp.float32)
    c = jnp.zeros((B, H), jnp.float32)

    def step(carry, xt):
        h, c = carry
        gates = (jnp.dot(xt, w_ih, preferred_element_type=jnp.float32)
                 + jnp.dot(h.astype(jnp.bfloat16), w_hh,
                           preferred_element_type=jnp.float32)
                 + b)
        i = jax.nn.sigmoid(gates[:, 0 * H:1 * H])
        f = jax.nn.sigmoid(gates[:, 1 * H:2 * H])
        g = jnp.tanh(gates[:, 2 * H:3 * H])
        o = jax.nn.sigmoid(gates[:, 3 * H:4 * H])
        c = f * c + i * g
        h = o * jnp.tanh(c)
        return (h, c), None

    (h, c), _ = jax.lax.scan(step, (h, c), x)
    return jnp.dot(h.astype(jnp.bfloat16), w_p,
                   preferred_element_type=jnp.float32) + b_p


if __name__ == "__main__":
    vocab_size, emb_dim, hidden_dim, pred_num = 50, 32, 32, 8
    seq_len, batch = 8, 2

    key = jax.random.PRNGKey(0)
    k_param, k_seq = jax.random.split(key)
    params = init_params(k_param, vocab_size, emb_dim, hidden_dim, pred_num)
    seq = jax.random.randint(k_seq, (seq_len, batch), 0, vocab_size, jnp.int32)

    preds = simple_bilstm_forward(seq, params)
    preds = jax.block_until_ready(preds)

    ref = reference_forward(seq, params)
    assert preds.shape == (batch, pred_num)
    max_err = float(jnp.max(jnp.abs(preds - ref)))
    assert jnp.allclose(preds, ref, atol=2e-3, rtol=2e-3), f"max_err={max_err}"

    print("KERNEL_OK")
</pallas_src>

<mosaic_0001>
module attributes {stable_mosaic.version = 11 : i64} {
  func.func @_lstm_kernel(%arg0: i32, %arg1: i32, %arg2: memref<1x64x32xbf16, #tpu.memory_space<vmem>>, %arg3: memref<32x512xbf16, #tpu.memory_space<vmem>>, %arg4: memref<128x512xbf16, #tpu.memory_space<vmem>>, %arg5: memref<1x512xf32, #tpu.memory_space<vmem>>, %arg6: memref<128x128xbf16, #tpu.memory_space<vmem>>, %arg7: memref<1x128xf32, #tpu.memory_space<vmem>>, %arg8: memref<8x128xf32, #tpu.memory_space<vmem>>, %arg9: memref<8x128xf32, #tpu.memory_space<vmem>>, %arg10: memref<8x128xf32, #tpu.memory_space<vmem>>, %arg11: memref<64x512xf32, #tpu.memory_space<vmem>>) attributes {dimension_semantics = [#tpu.dimension_semantics<parallel>, #tpu.dimension_semantics<arbitrary>], iteration_bounds = array<i64: 1, 1>, scalar_prefetch = 0 : i64, scratch_operands = 3 : i64, tpu.core_type = #tpu.core_type<tc>, window_params = [{transform_indices = @transform_0, window_bounds = array<i64: 1, 64, 32>}, {pipeline_mode = #tpu.pipeline_mode<synchronous>, transform_indices = @transform_1, window_bounds = array<i64: 32, 512>}, {pipeline_mode = #tpu.pipeline_mode<synchronous>, transform_indices = @transform_2, window_bounds = array<i64: 128, 512>}, {pipeline_mode = #tpu.pipeline_mode<synchronous>, transform_indices = @transform_3, window_bounds = array<i64: 1, 512>}, {pipeline_mode = #tpu.pipeline_mode<synchronous>, transform_indices = @transform_4, window_bounds = array<i64: 128, 128>}, {pipeline_mode = #tpu.pipeline_mode<synchronous>, transform_indices = @transform_5, window_bounds = array<i64: 1, 128>}, {transform_indices = @transform_6, window_bounds = array<i64: 8, 128>}]} {
    %c0_i32 = arith.constant 0 : i32
    %0 = arith.cmpi eq, %arg1, %c0_i32 : i32
    %1 = arith.extui %0 : i1 to i32
    %c0_i32_0 = arith.constant 0 : i32
    %2 = arith.cmpi ne, %1, %c0_i32_0 : i32
    scf.if %2 {
      %cst_22 = arith.constant 0.000000e+00 : f32
      %24 = vector.broadcast %cst_22 : f32 to vector<8x128xf32>
      %c0_23 = arith.constant 0 : index
      %c0_24 = arith.constant 0 : index
      %25 = vector.load %arg9[%c0_23, %c0_24] : memref<8x128xf32, #tpu.memory_space<vmem>>, vector<8x128xf32>
      tpu.vector_store %arg9[%c0_23, %c0_24], %24 {strides = array<i32>} : memref<8x128xf32, #tpu.memory_space<vmem>>, vector<8x128xf32>,
      %cst_25 = arith.constant 0.000000e+00 : f32
      %26 = vector.broadcast %cst_25 : f32 to vector<8x128xf32>
      %c0_26 = arith.constant 0 : index
      %c0_27 = arith.constant 0 : index
      %27 = vector.load %arg10[%c0_26, %c0_27] : memref<8x128xf32, #tpu.memory_space<vmem>>, vector<8x128xf32>
      tpu.vector_store %arg10[%c0_26, %c0_27], %26 {strides = array<i32>} : memref<8x128xf32, #tpu.memory_space<vmem>>, vector<8x128xf32>,
    } else {
    }
    %c0 = arith.constant 0 : index
    %c0_1 = arith.constant 0 : index
    %c0_2 = arith.constant 0 : index
    %3 = vector.load %arg2[%c0, %c0_1, %c0_2] : memref<1x64x32xbf16, #tpu.memory_space<vmem>>, vector<1x64x32xbf16>
    %4 = vector.shape_cast %3 : vector<1x64x32xbf16> to vector<64x32xbf16>
    %c0_3 = arith.constant 0 : index
    %c0_4 = arith.constant 0 : index
    %5 = vector.load %arg3[%c0_3, %c0_4] : memref<32x512xbf16, #tpu.memory_space<vmem>>, vector<32x512xbf16>
    %cst = arith.constant dense<0.000000e+00> : vector<64x512xf32>
    %6 = tpu.matmul %4, %5, %cst {dimension_numbers = #tpu.dot_dimension_numbers<[1], [0], [0], [1], [0, 0, 1, 1], [], []>} : vector<64x32xbf16>, vector<32x512xbf16>, vector<64x512xf32> -> vector<64x512xf32>
    %c0_5 = arith.constant 0 : index
    %c0_6 = arith.constant 0 : index
    %7 = vector.load %arg5[%c0_5, %c0_6] : memref<1x512xf32, #tpu.memory_space<vmem>>, vector<1x512xf32>
    %8 = vector.broadcast %7 : vector<1x512xf32> to vector<64x512xf32>
    %9 = arith.addf %6, %8 : vector<64x512xf32>
    %c0_7 = arith.constant 0 : index
    %c0_8 = arith.constant 0 : index
    %10 = vector.load %arg11[%c0_7, %c0_8] : memref<64x512xf32, #tpu.memory_space<vmem>>, vector<64x512xf32>
    tpu.vector_store %arg11[%c0_7, %c0_8], %9 {strides = array<i32>} : memref<64x512xf32, #tpu.memory_space<vmem>>, vector<64x512xf32>,
    %c8_i32 = arith.constant 8 : i32
    %11 = arith.muli %arg1, %c8_i32 : i32
    %c8_i32_9 = arith.constant 8 : i32
    %12 = arith.subi %c8_i32_9, %11 : i32
    %c8_i32_10 = arith.constant 8 : i32
    %13 = arith.minsi %c8_i32_10, %12 : i32
    %c0_11 = arith.constant 0 : index
    %c0_12 = arith.constant 0 : index
    %14 = vector.load %arg9[%c0_11, %c0_12] : memref<8x128xf32, #tpu.memory_space<vmem>>, vector<8x128xf32>
    %c0_13 = arith.constant 0 : index
    %c0_14 = arith.constant 0 : index
    %15 = vector.load %arg10[%c0_13, %c0_14] : memref<8x128xf32, #tpu.memory_space<vmem>>, vector<8x128xf32>
    %c0_i32_15 = arith.constant 0 : i32
    %16 = arith.subi %13, %c0_i32_15 : i32
    %17 = arith.addi %c0_i32_15, %16 : i32
    %c1_i32 = arith.constant 1 : i32
    %18:2 = scf.for %arg12 = %c0_i32_15 to %17 step %c1_i32 iter_args(%arg13 = %14, %arg14 = %15) -> (vector<8x128xf32>, vector<8x128xf32>)  : i32 {
      %c8_i32_22 = arith.constant 8 : i32
      %24 = arith.muli %arg12, %c8_i32_22 : i32
      %25 = tpu.assume_multiple %24, 8 : i32
      %26 = arith.index_cast %25 : i32 to index
      %c0_23 = arith.constant 0 : index
      %27 = vector.load %arg11[%26, %c0_23] : memref<64x512xf32, #tpu.memory_space<vmem>>, vector<8x512xf32>
      %28 = arith.truncf %arg13 : vector<8x128xf32> to vector<8x128xbf16>
      %c0_24 = arith.constant 0 : index
      %c0_25 = arith.constant 0 : index
      %29 = vector.load %arg4[%c0_24, %c0_25] : memref<128x512xbf16, #tpu.memory_space<vmem>>, vector<128x512xbf16>
      %cst_26 = arith.constant dense<0.000000e+00> : vector<8x512xf32>
      %30 = tpu.matmul %28, %29, %cst_26 {dimension_numbers = #tpu.dot_dimension_numbers<[1], [0], [0], [1], [0, 0, 1, 1], [], []>} : vector<8x128xbf16>, vector<128x512xbf16>, vector<8x512xf32> -> vector<8x512xf32>
      %31 = arith.addf %27, %30 : vector<8x512xf32>
      %32 = vector.extract_strided_slice %31 {offsets = [0, 0], sizes = [8, 128], strides = [1, 1]} : vector<8x512xf32> to vector<8x128xf32>
      %33 = arith.negf %32 : vector<8x128xf32>
      %34 = math.exp %33 : vector<8x128xf32>
      %cst_27 = arith.constant 1.000000e+00 : f32
      %35 = vector.broadcast %cst_27 : f32 to vector<8x128xf32>
      %36 = arith.addf %35, %34 : vector<8x128xf32>
      %37 = arith.divf %35, %36 : vector<8x128xf32>
      %38 = vector.extract_strided_slice %31 {offsets = [0, 128], sizes = [8, 128], strides = [1, 1]} : vector<8x512xf32> to vector<8x128xf32>
      %39 = arith.negf %38 : vector<8x128xf32>
      %40 = math.exp %39 : vector<8x128xf32>
      %cst_28 = arith.constant 1.000000e+00 : f32
      %41 = vector.broadcast %cst_28 : f32 to vector<8x128xf32>
      %42 = arith.addf %41, %40 : vector<8x128xf32>
      %43 = arith.divf %41, %42 : vector<8x128xf32>
      %44 = vector.extract_strided_slice %31 {offsets = [0, 256], sizes = [8, 128], strides = [1, 1]} : vector<8x512xf32> to vector<8x128xf32>
      %45 = math.tanh %44 : vector<8x128xf32>
      %46 = vector.extract_strided_slice %31 {offsets = [0, 384], sizes = [8, 128], strides = [1, 1]} : vector<8x512xf32> to vector<8x128xf32>
      %47 = arith.negf %46 : vector<8x128xf32>
      %48 = math.exp %47 : vector<8x128xf32>
      %cst_29 = arith.constant 1.000000e+00 : f32
      %49 = vector.broadcast %cst_29 : f32 to vector<8x128xf32>
      %50 = arith.addf %49, %48 : vector<8x128xf32>
      %51 = arith.divf %49, %50 : vector<8x128xf32>
      %52 = arith.mulf %43, %arg14 : vector<8x128xf32>
      %53 = arith.mulf %37, %45 : vector<8x128xf32>
      %54 = arith.addf %52, %53 : vector<8x128xf32>
      %55 = math.tanh %54 : vector<8x128xf32>
      %56 = arith.mulf %51, %55 : vector<8x128xf32>
      scf.yield %56, %54 : vector<8x128xf32>, vector<8x128xf32>
    }
    %c0_16 = arith.constant 0 : index
    %c0_17 = arith.constant 0 : index
    %19 = vector.load %arg9[%c0_16, %c0_17] : memref<8x128xf32, #tpu.memory_space<vmem>>, vector<8x128xf32>
    tpu.vector_store %arg9[%c0_16, %c0_17], %18#0 {strides = array<i32>} : memref<8x128xf32, #tpu.memory_space<vmem>>, vector<8x128xf32>,
    %c0_18 = arith.constant 0 : index
    %c0_19 = arith.constant 0 : index
    %20 = vector.load %arg10[%c0_18, %c0_19] : memref<8x128xf32, #tpu.memory_space<vmem>>, vector<8x128xf32>
    tpu.vector_store %arg10[%c0_18, %c0_19], %18#1 {strides = array<i32>} : memref<8x128xf32, #tpu.memory_space<vmem>>, vector<8x128xf32>,
    %c0_i32_20 = arith.constant 0 : i32
    %21 = arith.cmpi eq, %arg1, %c0_i32_20 : i32
    %22 = arith.extui %21 : i1 to i32
    %c0_i32_21 = arith.constant 0 : i32
    %23 = arith.cmpi ne, %22, %c0_i32_21 : i32
    scf.if %23 {
      %24 = arith.truncf %18#0 : vector<8x128xf32> to vector<8x128xbf16>
      %c0_22 = arith.constant 0 : index
      %c0_23 = arith.constant 0 : index
      %25 = vector.load %arg6[%c0_22, %c0_23] : memref<128x128xbf16, #tpu.memory_space<vmem>>, vector<128x128xbf16>
      %cst_24 = arith.constant dense<0.000000e+00> : vector<8x128xf32>
      %26 = tpu.matmul %24, %25, %cst_24 {dimension_numbers = #tpu.dot_dimension_numbers<[1], [0], [0], [1], [0, 0, 1, 1], [], []>} : vector<8x128xbf16>, vector<128x128xbf16>, vector<8x128xf32> -> vector<8x128xf32>
      %c0_25 = arith.constant 0 : index
      %c0_26 = arith.constant 0 : index
      %27 = vector.load %arg7[%c0_25, %c0_26] : memref<1x128xf32, #tpu.memory_space<vmem>>, vector<1x128xf32>
      %28 = vector.broadcast %27 : vector<1x128xf32> to vector<8x128xf32>
      %29 = arith.addf %26, %28 : vector<8x128xf32>
      %c0_27 = arith.constant 0 : index
      %c0_28 = arith.constant 0 : index
      %30 = vector.load %arg8[%c0_27, %c0_28] : memref<8x128xf32, #tpu.memory_space<vmem>>, vector<8x128xf32>
      tpu.vector_store %arg8[%c0_27, %c0_28], %29 {strides = array<i32>} : memref<8x128xf32, #tpu.memory_space<vmem>>, vector<8x128xf32>,
    } else {
    }
    return
  }
  func.func @transform_0(%arg0: i32, %arg1: i32) -> (i32, i32, i32) {
    %c0_i32 = arith.constant 0 : i32
    %c0_i32_0 = arith.constant 0 : i32
    return %arg0, %arg1, %c0_i32 : i32, i32, i32
  }
  func.func @transform_1(%arg0: i32, %arg1: i32) -> (i32, i32) {
    %c0_i32 = arith.constant 0 : i32
    %c0_i32_0 = arith.constant 0 : i32
    %c0_i32_1 = arith.constant 0 : i32
    return %c0_i32, %c0_i32_0 : i32, i32
  }
  func.func @transform_2(%arg0: i32, %arg1: i32) -> (i32, i32) {
    %c0_i32 = arith.constant 0 : i32
    %c0_i32_0 = arith.constant 0 : i32
    %c0_i32_1 = arith.constant 0 : i32
    return %c0_i32, %c0_i32_0 : i32, i32
  }
  func.func @transform_3(%arg0: i32, %arg1: i32) -> (i32, i32) {
    %c0_i32 = arith.constant 0 : i32
    %c0_i32_0 = arith.constant 0 : i32
    %c0_i32_1 = arith.constant 0 : i32
    return %c0_i32, %c0_i32_0 : i32, i32
  }
  func.func @transform_4(%arg0: i32, %arg1: i32) -> (i32, i32) {
    %c0_i32 = arith.constant 0 : i32
    %c0_i32_0 = arith.constant 0 : i32
    %c0_i32_1 = arith.constant 0 : i32
    return %c0_i32, %c0_i32_0 : i32, i32
  }
  func.func @transform_5(%arg0: i32, %arg1: i32) -> (i32, i32) {
    %c0_i32 = arith.constant 0 : i32
    %c0_i32_0 = arith.constant 0 : i32
    %c0_i32_1 = arith.constant 0 : i32
    return %c0_i32, %c0_i32_0 : i32, i32
  }
  func.func @transform_6(%arg0: i32, %arg1: i32) -> (i32, i32) {
    %c0_i32 = arith.constant 0 : i32
    %c0_i32_0 = arith.constant 0 : i32
    return %arg0, %c0_i32 : i32, i32
  }
}

</mosaic_0001>

<llo_original>
// kernel: tpu_custom_call.1
$region0: #{tpu_custom_call.1}
  #allocation0 [shape = 'u32[]', space=smem, size = 0x4, offset = 0x4, fixed_abs, tag = 'smem constant byte address 0x4 - core index']
  #allocation1 [shape = 'u32[144,128]{1,0:T(1,128)}', space=vmem, size = 0x12000, scoped, tag = 'internal scratch']
  #allocation2 [shape = 'f32[8,128]{1,0:T(8,128)}', space=vmem, size = 0x1000, scoped, tag = 'scratch operand']
  #allocation3 [shape = 'f32[8,128]{1,0:T(8,128)}', space=vmem, size = 0x1000, scoped, tag = 'scratch operand']
  #allocation4 [shape = 'f32[64,512]{1,0:T(8,128)}', space=vmem, size = 0x20000, scoped, tag = 'scratch operand']
  %s0 = inlined_call_operand.vmem [shape: bf16[1,64,32], index: 0, kind: input, shape index: {}]
  %s1 = inlined_call_operand.hbm [shape: bf16[32,512], index: 1, kind: input, shape index: {}]
  %s2 = inlined_call_operand.hbm [shape: bf16[128,512], index: 2, kind: input, shape index: {}]
  %s3 = inlined_call_operand.vmem [shape: f32[1,512], index: 3, kind: input, shape index: {}]
  %s4 = inlined_call_operand.hbm [shape: bf16[128,128], index: 4, kind: input, shape index: {}]
  %s5 = inlined_call_operand.vmem [shape: f32[1,128], index: 5, kind: input, shape index: {}]
  %s6 = inlined_call_operand.hbm [shape: f32[8,128], index: 6, kind: output, shape index: {}]
  %s7 = sld [smem:[#allocation0]]
  $region61: #{tpu_custom_call.1} parent=0
    _
  %s9 = ssub.s32 1, %s7
  %s10 = scalar_select 0, %s9, %s7
  $region1: #{tpu_custom_call.1} parent=0
    #allocation5 [shape = 'u8[32768]{0}', space=vmem, size = 0x8000, scoped, tag = 'input window, operand 1, single buffered']
    #allocation6 [shape = 's32[1]{0}', space=sflag, size = 0x4, scoped, tag = 'scoped memory for tpu_custom_call.1']
    #allocation7 [shape = 's32[1]{0}', space=sflag, size = 0x4, scoped, tag = 'scoped memory for tpu_custom_call.1']
    #allocation8 [shape = 'u8[131072]{0}', space=vmem, size = 0x20000, scoped, tag = 'input window, operand 2, single buffered']
    #allocation9 [shape = 's32[1]{0}', space=sflag, size = 0x4, scoped, tag = 'scoped memory for tpu_custom_call.1']
    #allocation10 [shape = 'u8[32768]{0}', space=vmem, size = 0x8000, scoped, tag = 'input window, operand 4, single buffered']
    #allocation11 [shape = 'u8[4096]{0}', space=vmem, size = 0x1000, scoped, tag = 'output window, operand 0, single buffered']
    %11 = vsyncpa [#allocation6], 0
    %12 = vsyncpa [#allocation9], 0
    %13 = vsyncpa [#allocation7], 0
    // Predicated region
    $region2: #{tpu_custom_call.1} parent=1 // pred_check
      _
    $region3: #{tpu_custom_call.1} parent=1 // pred_check_branch
      %15 = sbr.rel (0) target = $region5
    $region4: #{tpu_custom_call.1} parent=1 // pred_region
      _
    $region5: #{tpu_custom_call.1} parent=1 // pred_fallthru
      _
    // Predicated region
    $region6: #{tpu_custom_call.1} parent=1 // pred_check
      _
    $region7: #{tpu_custom_call.1} parent=1 // pred_check_branch
      %17 = sbr.rel (0) target = $region9
    $region8: #{tpu_custom_call.1} parent=1 // pred_region
      %s19 = ssub.s32 1024, 1024
      %20 = vsyncadd [#allocation6], %s19
      %s21 = sshll.u32 [#allocation5], 4
      %s22 = int_to_ptr.vmem [resolvable:$true] %s21
      %27 = dma.hbm_to_vmem [thread:$0]  %s1, 1024, %s22, [#allocation6], 256, 256, 16
    $region9: #{tpu_custom_call.1} parent=1 // pred_fallthru
      _
    // Predicated region
    $region10: #{tpu_custom_call.1} parent=1 // pred_check
      _
    $region11: #{tpu_custom_call.1} parent=1 // pred_check_branch
      %29 = sbr.rel (0) target = $region13
    $region12: #{tpu_custom_call.1} parent=1 // pred_region
      %s31 = ssub.s32 4096, 4096
      %32 = vsyncadd [#allocation9], %s31
      %s33 = sshll.u32 [#allocation8], 4
      %s34 = int_to_ptr.vmem [resolvable:$true] %s33
      %39 = dma.hbm_to_vmem [thread:$0]  %s2, 4096, %s34, [#allocation9], 256, 256, 16
    $region13: #{tpu_custom_call.1} parent=1 // pred_fallthru
      _
    // Predicated region
    $region14: #{tpu_custom_call.1} parent=1 // pred_check
      _
    $region15: #{tpu_custom_call.1} parent=1 // pred_check_branch
      %41 = sbr.rel (0) target = $region17
    $region16: #{tpu_custom_call.1} parent=1 // pred_region
      _
    $region17: #{tpu_custom_call.1} parent=1 // pred_fallthru
      _
    // Predicated region
    $region18: #{tpu_custom_call.1} parent=1 // pred_check
      _
    $region19: #{tpu_custom_call.1} parent=1 // pred_check_branch
      %43 = sbr.rel (0) target = $region21
    $region20: #{tpu_custom_call.1} parent=1 // pred_region
      %s45 = ssub.s32 1024, 1024
      %46 = vsyncadd [#allocation9], %s45
      %s47 = sshll.u32 [#allocation10], 4
      %s48 = int_to_ptr.vmem [resolvable:$true] %s47
      %53 = dma.hbm_to_vmem [thread:$0]  %s4, 1024, %s48, [#allocation9], 64, 64, 4
    $region21: #{tpu_custom_call.1} parent=1 // pred_fallthru
      _
    // Predicated region
    $region22: #{tpu_custom_call.1} parent=1 // pred_check
      _
    $region23: #{tpu_custom_call.1} parent=1 // pred_check_branch
      %55 = sbr.rel (0) target = $region25
    $region24: #{tpu_custom_call.1} parent=1 // pred_region
      _
    $region25: #{tpu_custom_call.1} parent=1 // pred_fallthru
      _
    // Predicated region
    $region26: #{tpu_custom_call.1} parent=1 // pred_check
      _
    $region27: #{tpu_custom_call.1} parent=1 // pred_check_branch
      %57 = sbr.rel (0) target = $region29
    $region28: #{tpu_custom_call.1} parent=1 // pred_region
      %58 = dma.done [#allocation6], 1024
    $region29: #{tpu_custom_call.1} parent=1 // pred_fallthru
      _
    // Predicated region
    $region30: #{tpu_custom_call.1} parent=1 // pred_check
      _
    $region31: #{tpu_custom_call.1} parent=1 // pred_check_branch
      %60 = sbr.rel (0) target = $region33
    $region32: #{tpu_custom_call.1} parent=1 // pred_region
      %61 = dma.done [#allocation9], 4096
    $region33: #{tpu_custom_call.1} parent=1 // pred_fallthru
      _
    // Predicated region
    $region34: #{tpu_custom_call.1} parent=1 // pred_check
      _
    $region35: #{tpu_custom_call.1} parent=1 // pred_check_branch
      %63 = sbr.rel (0) target = $region37
    $region36: #{tpu_custom_call.1} parent=1 // pred_region
      %64 = dma.done [#allocation9], 1024
    $region37: #{tpu_custom_call.1} parent=1 // pred_fallthru
      _
    %p66 = scmp.eq.s32.totalorder 0, 0
    // Predicated region
    $region38: #{tpu_custom_call.1} parent=1 // pred_check
      %p67 = pneg %p66
    $region39: #{tpu_custom_call.1} parent=1 // pred_check_branch
      %69 = sbr.rel (%p67) target = $region41
    $region40: #{tpu_custom_call.1} parent=1 // pred_region
      %70 = vst [vmem:[#allocation2] sm:$0xff] 0.0
      %71 = vst [vmem:[#allocation3] sm:$0xff] 0.0
    $region41: #{tpu_custom_call.1} parent=1 // pred_fallthru
      _
    %v72 = vld [vmem:[%s0] sm:$0xf]
    %v73 = vld [vmem:[%s0 + $0x4] sm:$0xf]
    %v74 = vld [vmem:[%s0 + $0x8] sm:$0xf]
    %v75 = vld [vmem:[%s0 + $0xc] sm:$0xf]
    %v76 = vld [vmem:[%s0 + $0x10] sm:$0xf]
    %v77 = vld [vmem:[%s0 + $0x14] sm:$0xf]
    %v78 = vld [vmem:[%s0 + $0x18] sm:$0xf]
    %v79 = vld [vmem:[%s0 + $0x1c] sm:$0xf]
    %v80 = vld [vmem:[#allocation5] sm:$0xff]
    %v81 = vld [vmem:[#allocation5 + $0x8] sm:$0xff]
    %v82 = vld [vmem:[#allocation5 + $0x10] sm:$0xff]
    %v83 = vld [vmem:[#allocation5 + $0x18] sm:$0xff]
    %v84 = vld [vmem:[#allocation5 + $0x20] sm:$0xff]
    %v85 = vld [vmem:[#allocation5 + $0x28] sm:$0xff]
    %v86 = vld [vmem:[#allocation5 + $0x30] sm:$0xff]
    %v87 = vld [vmem:[#allocation5 + $0x38] sm:$0xff]
    %v88 = vld [vmem:[%s3] sm:$0xf]
    %v90 = vlaneseq
    %v91 = vshrl.u32 %v90, 7
    %v92 = vsub.s32 0, %v91
    %v93 = vrot.slane %v88, %v92
    %v94 = vlaneseq
    %v95 = vshrl.u32 %v94, 7
    %v96 = vsub.s32 1, %v95
    %v97 = vrot.slane %v88, %v96
    %v98 = vlaneseq
    %v99 = vshrl.u32 %v98, 7
    %v100 = vsub.s32 2, %v99
    %v101 = vrot.slane %v88, %v100
    %v102 = vlaneseq
    %v103 = vshrl.u32 %v102, 7
    %v104 = vsub.s32 3, %v103
    %v105 = vrot.slane %v88, %v104
    %v118 = vunpack.c.l.b16 %v72
    %v119 = vunpack.c.l.b16 %v73
    %v120 = vunpack.c.l.b16 %v74
    %v121 = vunpack.c.l.b16 %v75
    %v122 = vunpack.c.l.b16 %v76
    %v123 = vunpack.c.l.b16 %v77
    %v124 = vunpack.c.l.b16 %v78
    %v125 = vunpack.c.l.b16 %v79
    %v126 = vpack.c.b16 %v119, %v118
    %v127 = vpack.c.b16 %v121, %v120
    %v128 = vpack.c.b16 %v123, %v122
    %v129 = vpack.c.b16 %v125, %v124
    %v138 = vunpack.c.l.b16 %v80
    %v139 = vunpack.c.h.b16 %v80
    %v140 = vunpack.c.l.b16 %v81
    %v141 = vunpack.c.h.b16 %v81
    %v142 = vunpack.c.l.b16 %v82
    %v143 = vunpack.c.h.b16 %v82
    %v144 = vunpack.c.l.b16 %v83
    %v145 = vunpack.c.h.b16 %v83
    %v146 = vunpack.c.l.b16 %v84
    %v147 = vunpack.c.h.b16 %v84
    %v148 = vunpack.c.l.b16 %v85
    %v149 = vunpack.c.h.b16 %v85
    %v150 = vunpack.c.l.b16 %v86
    %v151 = vunpack.c.h.b16 %v86
    %v152 = vunpack.c.l.b16 %v87
    %v153 = vunpack.c.h.b16 %v87
    %v154 = vpack.c.b16 %v142, %v138
    %v155 = vpack.c.b16 %v143, %v139
    %v156 = vpack.c.b16 %v144, %v140
    %v157 = vpack.c.b16 %v145, %v141
    %v158 = vpack.c.b16 %v150, %v146
    %v159 = vpack.c.b16 %v151, %v147
    %v160 = vpack.c.b16 %v152, %v148
    %v161 = vpack.c.b16 %v153, %v149
    %vm170 = vcmask 261120
    %v172 = vsel %vm170, %v126, 0
    %v175 = vsel %vm170, %v127, 0
    %v178 = vsel %vm170, %v128, 0
    %v181 = vsel %vm170, %v129, 0
    %183 = vmatprep.subr.bf16.mxu0 0
    %184 = vmatpush1.bf16.msra.mxu0 0
    %185 = vmatprep.subr.bf16.mxu0 0
    %186 = vmatpush1.bf16.msra.mxu0 0
    %187 = vmatprep.subr.bf16.mxu0 0
    %188 = vmatpush1.bf16.msra.mxu0 0
    %189 = vmatprep.subr.bf16.mxu0 0
    %190 = vmatpush1.bf16.msra.mxu0 0
    %191 = vmatprep.subr.bf16.mxu0 0
    %192 = vmatpush1.bf16.msra.mxu0 0
    %193 = vmatprep.subr.bf16.mxu0 0
    %194 = vmatpush1.bf16.msra.mxu0 0
    %195 = vmatprep.subr.bf16.mxu0 %v159
    %196 = vmatpush1.bf16.msra.mxu0 %v158
    %197 = vmatprep.subr.bf16.mxu0 %v155
    %198 = vmatpush1.bf16.msra.mxu0 %v154
    %199 = vmatprep.subr.bf16.mxu0 0
    %200 = vmatpush2.bf16.msra.mxu0 0
    %201 = vmatprep.subr.bf16.mxu0 0
    %202 = vmatpush2.bf16.msra.mxu0 0
    %203 = vmatprep.subr.bf16.mxu0 0
    %204 = vmatpush2.bf16.msra.mxu0 0
    %205 = vmatprep.subr.bf16.mxu0 0
    %206 = vmatpush2.bf16.msra.mxu0 0
    %207 = vmatprep.subr.bf16.mxu0 0
    %208 = vmatpush2.bf16.msra.mxu0 0
    %209 = vmatprep.subr.bf16.mxu0 0
    %210 = vmatpush2.bf16.msra.mxu0 0
    %211 = vmatprep.subr.bf16.mxu0 0
    %212 = vmatpush2.bf16.msra.mxu0 0
    %213 = vmatprep.subr.bf16.mxu0 0
    %214 = vmatpush2.bf16.msra.mxu0 0
    %215 = vmatprep.mubr.bf16.mxu0 0
    %216 = vmatmul.mubr.bf16.gmra.mxu0 %v172
    %v217 = vpop.f32.mrf.mxu0
    %v218 = vadd.f32 %v93, %v217
    %v219 = vpop.f32.mrf.mxu0
    %v220 = vadd.f32 %v97, %v219
    %v221 = vpop.f32.mrf.mxu0
    %v222 = vadd.f32 %v93, %v221
    %v223 = vpop.f32.mrf.mxu0
    %v224 = vadd.f32 %v97, %v223
    %225 = vmatprep.mubr.bf16.mxu0 0
    %226 = vmatmul.mubr.bf16.gmra.mxu0 %v175
    %v227 = vpop.f32.mrf.mxu0
    %v228 = vadd.f32 %v93, %v227
    %v229 = vpop.f32.mrf.mxu0
    %v230 = vadd.f32 %v97, %v229
    %v231 = vpop.f32.mrf.mxu0
    %v232 = vadd.f32 %v93, %v231
    %v233 = vpop.f32.mrf.mxu0
    %v234 = vadd.f32 %v97, %v233
    %235 = vmatprep.mubr.bf16.mxu0 0
    %236 = vmatmul.mubr.bf16.gmra.mxu0 %v178
    %v237 = vpop.f32.mrf.mxu0
    %v238 = vadd.f32 %v93, %v237
    %v239 = vpop.f32.mrf.mxu0
    %v240 = vadd.f32 %v97, %v239
    %v241 = vpop.f32.mrf.mxu0
    %v242 = vadd.f32 %v93, %v241
    %v243 = vpop.f32.mrf.mxu0
    %v244 = vadd.f32 %v97, %v243
    %245 = vmatprep.mubr.bf16.mxu0 0
    %246 = vmatmul.mubr.bf16.gmra.mxu0 %v181
    %v247 = vpop.f32.mrf.mxu0
    %v248 = vadd.f32 %v93, %v247
    %v249 = vpop.f32.mrf.mxu0
    %v250 = vadd.f32 %v97, %v249
    %v251 = vpop.f32.mrf.mxu0
    %v252 = vadd.f32 %v93, %v251
    %v253 = vpop.f32.mrf.mxu0
    %v254 = vadd.f32 %v97, %v253
    %255 = vdwg.mxu0
    %256 = vmatprep.subr.bf16.mxu0 0
    %257 = vmatpush1.bf16.msra.mxu0 0
    %258 = vmatprep.subr.bf16.mxu0 0
    %259 = vmatpush1.bf16.msra.mxu0 0
    %260 = vmatprep.subr.bf16.mxu0 0
    %261 = vmatpush1.bf16.msra.mxu0 0
    %262 = vmatprep.subr.bf16.mxu0 0
    %263 = vmatpush1.bf16.msra.mxu0 0
    %264 = vmatprep.subr.bf16.mxu0 0
    %265 = vmatpush1.bf16.msra.mxu0 0
    %266 = vmatprep.subr.bf16.mxu0 0
    %267 = vmatpush1.bf16.msra.mxu0 0
    %268 = vmatprep.subr.bf16.mxu0 %v161
    %269 = vmatpush1.bf16.msra.mxu0 %v160
    %270 = vmatprep.subr.bf16.mxu0 %v157
    %271 = vmatpush1.bf16.msra.mxu0 %v156
    %272 = vmatprep.subr.bf16.mxu0 0
    %273 = vmatpush2.bf16.msra.mxu0 0
    %274 = vmatprep.subr.bf16.mxu0 0
    %275 = vmatpush2.bf16.msra.mxu0 0
    %276 = vmatprep.subr.bf16.mxu0 0
    %277 = vmatpush2.bf16.msra.mxu0 0
    %278 = vmatprep.subr.bf16.mxu0 0
    %279 = vmatpush2.bf16.msra.mxu0 0
    %280 = vmatprep.subr.bf16.mxu0 0
    %281 = vmatpush2.bf16.msra.mxu0 0
    %282 = vmatprep.subr.bf16.mxu0 0
    %283 = vmatpush2.bf16.msra.mxu0 0
    %284 = vmatprep.subr.bf16.mxu0 0
    %285 = vmatpush2.bf16.msra.mxu0 0
    %286 = vmatprep.subr.bf16.mxu0 0
    %287 = vmatpush2.bf16.msra.mxu0 0
    %288 = vmatprep.mubr.bf16.mxu0 0
    %289 = vmatmul.mubr.bf16.gmra.mxu0 %v172
    %v290 = vpop.f32.mrf.mxu0
    %v291 = vadd.f32 %v101, %v290
    %v292 = vpop.f32.mrf.mxu0
    %v293 = vadd.f32 %v105, %v292
    %v294 = vpop.f32.mrf.mxu0
    %v295 = vadd.f32 %v101, %v294
    %v296 = vpop.f32.mrf.mxu0
    %v297 = vadd.f32 %v105, %v296
    %298 = vmatprep.mubr.bf16.mxu0 0
    %299 = vmatmul.mubr.bf16.gmra.mxu0 %v175
    %v300 = vpop.f32.mrf.mxu0
    %v301 = vadd.f32 %v101, %v300
    %v302 = vpop.f32.mrf.mxu0
    %v303 = vadd.f32 %v105, %v302
    %v304 = vpop.f32.mrf.mxu0
    %v305 = vadd.f32 %v101, %v304
    %v306 = vpop.f32.mrf.mxu0
    %v307 = vadd.f32 %v105, %v306
    %308 = vmatprep.mubr.bf16.mxu0 0
    %309 = vmatmul.mubr.bf16.gmra.mxu0 %v178
    %v310 = vpop.f32.mrf.mxu0
    %v311 = vadd.f32 %v101, %v310
    %v312 = vpop.f32.mrf.mxu0
    %v313 = vadd.f32 %v105, %v312
    %v314 = vpop.f32.mrf.mxu0
    %v315 = vadd.f32 %v101, %v314
    %v316 = vpop.f32.mrf.mxu0
    %v317 = vadd.f32 %v105, %v316
    %318 = vmatprep.mubr.bf16.mxu0 0
    %319 = vmatmul.mubr.bf16.gmra.mxu0 %v181
    %v320 = vpop.f32.mrf.mxu0
    %v321 = vadd.f32 %v101, %v320
    %v322 = vpop.f32.mrf.mxu0
    %v323 = vadd.f32 %v105, %v322
    %v324 = vpop.f32.mrf.mxu0
    %v325 = vadd.f32 %v101, %v324
    %v326 = vpop.f32.mrf.mxu0
    %v327 = vadd.f32 %v105, %v326
    %328 = vdwg.mxu0
    %329 = vst [vmem:[#allocation4] sm:$0xff] %v218
    %330 = vst [vmem:[#allocation4 + $0x8] sm:$0xff] %v220
    %331 = vst [vmem:[#allocation4 + $0x10] sm:$0xff] %v291
    %332 = vst [vmem:[#allocation4 + $0x18] sm:$0xff] %v293
    %333 = vst [vmem:[#allocation4 + $0x20] sm:$0xff] %v222
    %334 = vst [vmem:[#allocation4 + $0x28] sm:$0xff] %v224
    %335 = vst [vmem:[#allocation4 + $0x30] sm:$0xff] %v295
    %336 = vst [vmem:[#allocation4 + $0x38] sm:$0xff] %v297
    %337 = vst [vmem:[#allocation4 + $0x40] sm:$0xff] %v228
    %338 = vst [vmem:[#allocation4 + $0x48] sm:$0xff] %v230
    %339 = vst [vmem:[#allocation4 + $0x50] sm:$0xff] %v301
    %340 = vst [vmem:[#allocation4 + $0x58] sm:$0xff] %v303
    %341 = vst [vmem:[#allocation4 + $0x60] sm:$0xff] %v232
    %342 = vst [vmem:[#allocation4 + $0x68] sm:$0xff] %v234
    %343 = vst [vmem:[#allocation4 + $0x70] sm:$0xff] %v305
    %344 = vst [vmem:[#allocation4 + $0x78] sm:$0xff] %v307
    %345 = vst [vmem:[#allocation4 + $0x80] sm:$0xff] %v238
    %346 = vst [vmem:[#allocation4 + $0x88] sm:$0xff] %v240
    %347 = vst [vmem:[#allocation4 + $0x90] sm:$0xff] %v311
    %348 = vst [vmem:[#allocation4 + $0x98] sm:$0xff] %v313
    %349 = vst [vmem:[#allocation4 + $0xa0] sm:$0xff] %v242
    %350 = vst [vmem:[#allocation4 + $0xa8] sm:$0xff] %v244
    %351 = vst [vmem:[#allocation4 + $0xb0] sm:$0xff] %v315
    %352 = vst [vmem:[#allocation4 + $0xb8] sm:$0xff] %v317
    %353 = vst [vmem:[#allocation4 + $0xc0] sm:$0xff] %v248
    %354 = vst [vmem:[#allocation4 + $0xc8] sm:$0xff] %v250
    %355 = vst [vmem:[#allocation4 + $0xd0] sm:$0xff] %v321
    %356 = vst [vmem:[#allocation4 + $0xd8] sm:$0xff] %v323
    %357 = vst [vmem:[#allocation4 + $0xe0] sm:$0xff] %v252
    %358 = vst [vmem:[#allocation4 + $0xe8] sm:$0xff] %v254
    %359 = vst [vmem:[#allocation4 + $0xf0] sm:$0xff] %v325
    %360 = vst [vmem:[#allocation4 + $0xf8] sm:$0xff] %v327
    %s361 = smul.u32 0, 8
    %s362 = ssub.s32 8, %s361
    %p363 = scmp.lt.s32.totalorder %s362, 8
    %s364 = scalar_select %p363, %s362, 8
    %v365 = vld [vmem:[#allocation2] sm:$0xff]
    %v366 = vld [vmem:[#allocation3] sm:$0xff]
    // While loop
    $region42: #{tpu_custom_call.1} parent=1 // loop_pre_header
      _
    $region43: #{tpu_custom_call.1} parent=1 // loop_header
      %s368 = sphi 0, %s370
      %p369 = scmp.ge.s32.totalorder %s368, %s364
      %v373 = vphi %v365, %v687
      %v374 = vphi %v366, %v685
    $region44: #{tpu_custom_call.1} parent=1 // loop_header_branch
      %372 = sbr.rel (%p369) target = $region48
    $region45: #{tpu_custom_call.1} parent=1 // loop_body
      %s375 = smul.u32 %s368, 8
      %s376 = sshra.s32 %s375, 3
      %s377 = sand.u32 %s375, 7
      %s378 = smul.u32 %s376, 4
      %s379 = smul.addr %s378, 8
      %s380 = scalar_lea.vmem [#allocation4], %s379
      %v381 = vld [vmem:[%s380] sm:$0xff]
      %v382 = vld [vmem:[%s380 + $0x8] sm:$0xff]
      %v383 = vld [vmem:[%s380 + $0x10] sm:$0xff]
      %v384 = vld [vmem:[%s380 + $0x18] sm:$0xff]
      %v385 = vpack.c.bf16 %v373, %v373
      %v386 = vld [vmem:[#allocation8] sm:$0xff]
      %v387 = vld [vmem:[#allocation8 + $0x8] sm:$0xff]
      %v388 = vld [vmem:[#allocation8 + $0x10] sm:$0xff]
      %v389 = vld [vmem:[#allocation8 + $0x18] sm:$0xff]
      %v390 = vld [vmem:[#allocation8 + $0x20] sm:$0xff]
      %v391 = vld [vmem:[#allocation8 + $0x28] sm:$0xff]
      %v392 = vld [vmem:[#allocation8 + $0x30] sm:$0xff]
      %v393 = vld [vmem:[#allocation8 + $0x38] sm:$0xff]
      %v394 = vld [vmem:[#allocation8 + $0x40] sm:$0xff]
      %v395 = vld [vmem:[#allocation8 + $0x48] sm:$0xff]
      %v396 = vld [vmem:[#allocation8 + $0x50] sm:$0xff]
      %v397 = vld [vmem:[#allocation8 + $0x58] sm:$0xff]
      %v398 = vld [vmem:[#allocation8 + $0x60] sm:$0xff]
      %v399 = vld [vmem:[#allocation8 + $0x68] sm:$0xff]
      %v400 = vld [vmem:[#allocation8 + $0x70] sm:$0xff]
      %v401 = vld [vmem:[#allocation8 + $0x78] sm:$0xff]
      %v402 = vld [vmem:[#allocation8 + $0x80] sm:$0xff]
      %v403 = vld [vmem:[#allocation8 + $0x88] sm:$0xff]
      %v404 = vld [vmem:[#allocation8 + $0x90] sm:$0xff]
      %v405 = vld [vmem:[#allocation8 + $0x98] sm:$0xff]
      %v406 = vld [vmem:[#allocation8 + $0xa0] sm:$0xff]
      %v407 = vld [vmem:[#allocation8 + $0xa8] sm:$0xff]
      %v408 = vld [vmem:[#allocation8 + $0xb0] sm:$0xff]
      %v409 = vld [vmem:[#allocation8 + $0xb8] sm:$0xff]
      %v410 = vld [vmem:[#allocation8 + $0xc0] sm:$0xff]
      %v411 = vld [vmem:[#allocation8 + $0xc8] sm:$0xff]
      %v412 = vld [vmem:[#allocation8 + $0xd0] sm:$0xff]
      %v413 = vld [vmem:[#allocation8 + $0xd8] sm:$0xff]
      %v414 = vld [vmem:[#allocation8 + $0xe0] sm:$0xff]
      %v415 = vld [vmem:[#allocation8 + $0xe8] sm:$0xff]
      %v416 = vld [vmem:[#allocation8 + $0xf0] sm:$0xff]
      %v417 = vld [vmem:[#allocation8 + $0xf8] sm:$0xff]
      %v450 = vunpack.c.l.b16 %v386
      %v451 = vunpack.c.h.b16 %v386
      %v452 = vunpack.c.l.b16 %v387
      %v453 = vunpack.c.h.b16 %v387
      %v454 = vunpack.c.l.b16 %v388
      %v455 = vunpack.c.h.b16 %v388
      %v456 = vunpack.c.l.b16 %v389
      %v457 = vunpack.c.h.b16 %v389
      %v458 = vunpack.c.l.b16 %v390
      %v459 = vunpack.c.h.b16 %v390
      %v460 = vunpack.c.l.b16 %v391
      %v461 = vunpack.c.h.b16 %v391
      %v462 = vunpack.c.l.b16 %v392
      %v463 = vunpack.c.h.b16 %v392
      %v464 = vunpack.c.l.b16 %v393
      %v465 = vunpack.c.h.b16 %v393
      %v466 = vunpack.c.l.b16 %v394
      %v467 = vunpack.c.h.b16 %v394
      %v468 = vunpack.c.l.b16 %v395
      %v469 = vunpack.c.h.b16 %v395
      %v470 = vunpack.c.l.b16 %v396
      %v471 = vunpack.c.h.b16 %v396
      %v472 = vunpack.c.l.b16 %v397
      %v473 = vunpack.c.h.b16 %v397
      %v474 = vunpack.c.l.b16 %v398
      %v475 = vunpack.c.h.b16 %v398
      %v476 = vunpack.c.l.b16 %v399
      %v477 = vunpack.c.h.b16 %v399
      %v478 = vunpack.c.l.b16 %v400
      %v479 = vunpack.c.h.b16 %v400
      %v480 = vunpack.c.l.b16 %v401
      %v481 = vunpack.c.h.b16 %v401
      %v482 = vunpack.c.l.b16 %v402
      %v483 = vunpack.c.h.b16 %v402
      %v484 = vunpack.c.l.b16 %v403
      %v485 = vunpack.c.h.b16 %v403
      %v486 = vunpack.c.l.b16 %v404
      %v487 = vunpack.c.h.b16 %v404
      %v488 = vunpack.c.l.b16 %v405
      %v489 = vunpack.c.h.b16 %v405
      %v490 = vunpack.c.l.b16 %v406
      %v491 = vunpack.c.h.b16 %v406
      %v492 = vunpack.c.l.b16 %v407
      %v493 = vunpack.c.h.b16 %v407
      %v494 = vunpack.c.l.b16 %v408
      %v495 = vunpack.c.h.b16 %v408
      %v496 = vunpack.c.l.b16 %v409
      %v497 = vunpack.c.h.b16 %v409
      %v498 = vunpack.c.l.b16 %v410
      %v499 = vunpack.c.h.b16 %v410
      %v500 = vunpack.c.l.b16 %v411
      %v501 = vunpack.c.h.b16 %v411
      %v502 = vunpack.c.l.b16 %v412
      %v503 = vunpack.c.h.b16 %v412
      %v504 = vunpack.c.l.b16 %v413
      %v505 = vunpack.c.h.b16 %v413
      %v506 = vunpack.c.l.b16 %v414
      %v507 = vunpack.c.h.b16 %v414
      %v508 = vunpack.c.l.b16 %v415
      %v509 = vunpack.c.h.b16 %v415
      %v510 = vunpack.c.l.b16 %v416
      %v511 = vunpack.c.h.b16 %v416
      %v512 = vunpack.c.l.b16 %v417
      %v513 = vunpack.c.h.b16 %v417
      %v514 = vpack.c.b16 %v454, %v450
      %v515 = vpack.c.b16 %v455, %v451
      %v516 = vpack.c.b16 %v456, %v452
      %v517 = vpack.c.b16 %v457, %v453
      %v518 = vpack.c.b16 %v462, %v458
      %v519 = vpack.c.b16 %v463, %v459
      %v520 = vpack.c.b16 %v464, %v460
      %v521 = vpack.c.b16 %v465, %v461
      %v522 = vpack.c.b16 %v470, %v466
      %v523 = vpack.c.b16 %v471, %v467
      %v524 = vpack.c.b16 %v472, %v468
      %v525 = vpack.c.b16 %v473, %v469
      %v526 = vpack.c.b16 %v478, %v474
      %v527 = vpack.c.b16 %v479, %v475
      %v528 = vpack.c.b16 %v480, %v476
      %v529 = vpack.c.b16 %v481, %v477
      %v530 = vpack.c.b16 %v486, %v482
      %v531 = vpack.c.b16 %v487, %v483
      %v532 = vpack.c.b16 %v488, %v484
      %v533 = vpack.c.b16 %v489, %v485
      %v534 = vpack.c.b16 %v494, %v490
      %v535 = vpack.c.b16 %v495, %v491
      %v536 = vpack.c.b16 %v496, %v492
      %v537 = vpack.c.b16 %v497, %v493
      %v538 = vpack.c.b16 %v502, %v498
      %v539 = vpack.c.b16 %v503, %v499
      %v540 = vpack.c.b16 %v504, %v500
      %v541 = vpack.c.b16 %v505, %v501
      %v542 = vpack.c.b16 %v510, %v506
      %v543 = vpack.c.b16 %v511, %v507
      %v544 = vpack.c.b16 %v512, %v508
      %v545 = vpack.c.b16 %v513, %v509
      %578 = vmatprep.subr.bf16.mxu0 %v543
      %579 = vmatpush1.bf16.msra.mxu0 %v542
      %580 = vmatprep.subr.bf16.mxu0 %v539
      %581 = vmatpush1.bf16.msra.mxu0 %v538
      %582 = vmatprep.subr.bf16.mxu0 %v535
      %583 = vmatpush1.bf16.msra.mxu0 %v534
      %584 = vmatprep.subr.bf16.mxu0 %v531
      %585 = vmatpush1.bf16.msra.mxu0 %v530
      %586 = vmatprep.subr.bf16.mxu0 %v527
      %587 = vmatpush1.bf16.msra.mxu0 %v526
      %588 = vmatprep.subr.bf16.mxu0 %v523
      %589 = vmatpush1.bf16.msra.mxu0 %v522
      %590 = vmatprep.subr.bf16.mxu0 %v519
      %591 = vmatpush1.bf16.msra.mxu0 %v518
      %592 = vmatprep.subr.bf16.mxu0 %v515
      %593 = vmatpush1.bf16.msra.mxu0 %v514
      %594 = vmatprep.subr.bf16.mxu0 0
      %595 = vmatpush2.bf16.msra.mxu0 0
      %596 = vmatprep.subr.bf16.mxu0 0
      %597 = vmatpush2.bf16.msra.mxu0 0
      %598 = vmatprep.subr.bf16.mxu0 0
      %599 = vmatpush2.bf16.msra.mxu0 0
      %600 = vmatprep.subr.bf16.mxu0 0
      %601 = vmatpush2.bf16.msra.mxu0 0
      %602 = vmatprep.subr.bf16.mxu0 0
      %603 = vmatpush2.bf16.msra.mxu0 0
      %604 = vmatprep.subr.bf16.mxu0 0
      %605 = vmatpush2.bf16.msra.mxu0 0
      %606 = vmatprep.subr.bf16.mxu0 0
      %607 = vmatpush2.bf16.msra.mxu0 0
      %608 = vmatprep.subr.bf16.mxu0 0
      %609 = vmatpush2.bf16.msra.mxu0 0
      %610 = vmatprep.mubr.bf16.mxu0 0
      %611 = vmatmul.mubr.bf16.gmra.mxu0 %v385
      %v612 = vpop.f32.mrf.mxu0
      %v613 = vadd.f32 0.0, %v612
      %v614 = vpop.f32.mrf.mxu0
      %v615 = vadd.f32 0.0, %v614
      %v616 = vpop.f32.mrf.mxu0
      %v617 = vpop.f32.mrf.mxu0
      %618 = vdwg.mxu0
      %619 = vmatprep.subr.bf16.mxu0 %v545
      %620 = vmatpush1.bf16.msra.mxu0 %v544
      %621 = vmatprep.subr.bf16.mxu0 %v541
      %622 = vmatpush1.bf16.msra.mxu0 %v540
      %623 = vmatprep.subr.bf16.mxu0 %v537
      %624 = vmatpush1.bf16.msra.mxu0 %v536
      %625 = vmatprep.subr.bf16.mxu0 %v533
      %626 = vmatpush1.bf16.msra.mxu0 %v532
      %627 = vmatprep.subr.bf16.mxu0 %v529
      %628 = vmatpush1.bf16.msra.mxu0 %v528
      %629 = vmatprep.subr.bf16.mxu0 %v525
      %630 = vmatpush1.bf16.msra.mxu0 %v524
      %631 = vmatprep.subr.bf16.mxu0 %v521
      %632 = vmatpush1.bf16.msra.mxu0 %v520
      %633 = vmatprep.subr.bf16.mxu0 %v517
      %634 = vmatpush1.bf16.msra.mxu0 %v516
      %635 = vmatprep.subr.bf16.mxu0 0
      %636 = vmatpush2.bf16.msra.mxu0 0
      %637 = vmatprep.subr.bf16.mxu0 0
      %638 = vmatpush2.bf16.msra.mxu0 0
      %639 = vmatprep.subr.bf16.mxu0 0
      %640 = vmatpush2.bf16.msra.mxu0 0
      %641 = vmatprep.subr.bf16.mxu0 0
      %642 = vmatpush2.bf16.msra.mxu0 0
      %643 = vmatprep.subr.bf16.mxu0 0
      %644 = vmatpush2.bf16.msra.mxu0 0
      %645 = vmatprep.subr.bf16.mxu0 0
      %646 = vmatpush2.bf16.msra.mxu0 0
      %647 = vmatprep.subr.bf16.mxu0 0
      %648 = vmatpush2.bf16.msra.mxu0 0
      %649 = vmatprep.subr.bf16.mxu0 0
      %650 = vmatpush2.bf16.msra.mxu0 0
      %651 = vmatprep.mubr.bf16.mxu0 0
      %652 = vmatmul.mubr.bf16.gmra.mxu0 %v385
      %v653 = vpop.f32.mrf.mxu0
      %v654 = vadd.f32 0.0, %v653
      %v655 = vpop.f32.mrf.mxu0
      %v656 = vadd.f32 0.0, %v655
      %v657 = vpop.f32.mrf.mxu0
      %v658 = vpop.f32.mrf.mxu0
      %659 = vdwg.mxu0
      %v660 = vadd.f32 %v381, %v613
      %v661 = vadd.f32 %v382, %v615
      %v662 = vadd.f32 %v383, %v654
      %v663 = vadd.f32 %v384, %v656
      %v664 = vxor.u32 %v660, 2147483648
      %v665 = vmul.f32 %v664, 1.442695
      %v666 = vpow.pop %v665
      %v667 = vadd.f32 %v666, 1.0
      %v668 = vrcp.pop %v667
      %v669 = vmul.f32 1.0, %v668
      %v670 = vxor.u32 %v661, 2147483648
      %v671 = vmul.f32 %v670, 1.442695
      %v672 = vpow.pop %v671
      %v673 = vadd.f32 %v672, 1.0
      %v674 = vrcp.pop %v673
      %v675 = vmul.f32 1.0, %v674
      %v676 = vtanh.pop %v662
      %v677 = vxor.u32 %v663, 2147483648
      %v678 = vmul.f32 %v677, 1.442695
      %v679 = vpow.pop %v678
      %v680 = vadd.f32 %v679, 1.0
      %v681 = vrcp.pop %v680
      %v682 = vmul.f32 1.0, %v681
      %v683 = vmul.f32 %v675, %v374
      %v684 = vmul.f32 %v669, %v676
      %v685 = vadd.f32 %v683, %v684
      %v686 = vtanh.pop %v685
      %v687 = vmul.f32 %v682, %v686
    $region46: #{tpu_custom_call.1} parent=1 // loop_footer
      %s370 = sadd.s32 %s368, 1
    $region47: #{tpu_custom_call.1} parent=1 // loop_footer_branch
      %367 = sbr.rel target = $region43
    $region48: #{tpu_custom_call.1} parent=1 // loop_exit
      _
    %688 = vst [vmem:[#allocation2] sm:$0xff] %v373
    %689 = vst [vmem:[#allocation3] sm:$0xff] %v374
    // Predicated region
    $region49: #{tpu_custom_call.1} parent=1 // pred_check
      %p690 = pneg %p66
    $region50: #{tpu_custom_call.1} parent=1 // pred_check_branch
      %692 = sbr.rel (%p690) target = $region52
    $region51: #{tpu_custom_call.1} parent=1 // pred_region
      %v693 = vpack.c.bf16 %v373, %v373
      %v694 = vld [vmem:[#allocation10] sm:$0xf]
      %v695 = vld [vmem:[#allocation10 + $0x4] sm:$0xf]
      %v696 = vld [vmem:[#allocation10 + $0x8] sm:$0xf]
      %v697 = vld [vmem:[#allocation10 + $0xc] sm:$0xf]
      %v698 = vld [vmem:[#allocation10 + $0x10] sm:$0xf]
      %v699 = vld [vmem:[#allocation10 + $0x14] sm:$0xf]
      %v700 = vld [vmem:[#allocation10 + $0x18] sm:$0xf]
      %v701 = vld [vmem:[#allocation10 + $0x1c] sm:$0xf]
      %v702 = vld [vmem:[#allocation10 + $0x20] sm:$0xf]
      %v703 = vld [vmem:[#allocation10 + $0x24] sm:$0xf]
      %v704 = vld [vmem:[#allocation10 + $0x28] sm:$0xf]
      %v705 = vld [vmem:[#allocation10 + $0x2c] sm:$0xf]
      %v706 = vld [vmem:[#allocation10 + $0x30] sm:$0xf]
      %v707 = vld [vmem:[#allocation10 + $0x34] sm:$0xf]
      %v708 = vld [vmem:[#allocation10 + $0x38] sm:$0xf]
      %v709 = vld [vmem:[#allocation10 + $0x3c] sm:$0xf]
      %v710 = vld [vmem:[%s5] sm:$0x1]
      %v712 = vlaneseq
      %v713 = vshrl.u32 %v712, 7
      %v714 = vsub.s32 0, %v713
      %v715 = vrot.slane %v710, %v714
      %v733 = vunpack.c.l.b16 %v694
      %v734 = vunpack.c.l.b16 %v695
      %v735 = vunpack.c.l.b16 %v696
      %v736 = vunpack.c.l.b16 %v697
      %v737 = vunpack.c.l.b16 %v698
      %v738 = vunpack.c.l.b16 %v699
      %v739 = vunpack.c.l.b16 %v700
      %v740 = vunpack.c.l.b16 %v701
      %v741 = vunpack.c.l.b16 %v702
      %v742 = vunpack.c.l.b16 %v703
      %v743 = vunpack.c.l.b16 %v704
      %v744 = vunpack.c.l.b16 %v705
      %v745 = vunpack.c.l.b16 %v706
      %v746 = vunpack.c.l.b16 %v707
      %v747 = vunpack.c.l.b16 %v708
      %v748 = vunpack.c.l.b16 %v709
      %v749 = vpack.c.b16 %v734, %v733
      %v750 = vpack.c.b16 %v736, %v735
      %v751 = vpack.c.b16 %v738, %v737
      %v752 = vpack.c.b16 %v740, %v739
      %v753 = vpack.c.b16 %v742, %v741
      %v754 = vpack.c.b16 %v744, %v743
      %v755 = vpack.c.b16 %v746, %v745
      %v756 = vpack.c.b16 %v748, %v747
      %765 = vmatprep.subr.bf16.mxu0 0
      %766 = vmatpush1.bf16.msra.mxu0 %v756
      %767 = vmatprep.subr.bf16.mxu0 0
      %768 = vmatpush1.bf16.msra.mxu0 %v755
      %769 = vmatprep.subr.bf16.mxu0 0
      %770 = vmatpush1.bf16.msra.mxu0 %v754
      %771 = vmatprep.subr.bf16.mxu0 0
      %772 = vmatpush1.bf16.msra.mxu0 %v753
      %773 = vmatprep.subr.bf16.mxu0 0
      %774 = vmatpush1.bf16.msra.mxu0 %v752
      %775 = vmatprep.subr.bf16.mxu0 0
      %776 = vmatpush1.bf16.msra.mxu0 %v751
      %777 = vmatprep.subr.bf16.mxu0 0
      %778 = vmatpush1.bf16.msra.mxu0 %v750
      %779 = vmatprep.subr.bf16.mxu0 0
      %780 = vmatpush1.bf16.msra.mxu0 %v749
      %781 = vmatprep.subr.bf16.mxu0 0
      %782 = vmatpush2.bf16.msra.mxu0 0
      %783 = vmatprep.subr.bf16.mxu0 0
      %784 = vmatpush2.bf16.msra.mxu0 0
      %785 = vmatprep.subr.bf16.mxu0 0
      %786 = vmatpush2.bf16.msra.mxu0 0
      %787 = vmatprep.subr.bf16.mxu0 0
      %788 = vmatpush2.bf16.msra.mxu0 0
      %789 = vmatprep.subr.bf16.mxu0 0
      %790 = vmatpush2.bf16.msra.mxu0 0
      %791 = vmatprep.subr.bf16.mxu0 0
      %792 = vmatpush2.bf16.msra.mxu0 0
      %793 = vmatprep.subr.bf16.mxu0 0
      %794 = vmatpush2.bf16.msra.mxu0 0
      %795 = vmatprep.subr.bf16.mxu0 0
      %796 = vmatpush2.bf16.msra.mxu0 0
      %797 = vmatprep.mubr.bf16.mxu0 0
      %798 = vmatmul.mubr.bf16.gmra.mxu0 %v693
      %v799 = vpop.f32.mrf.mxu0
      %v800 = vadd.f32 %v715, %v799
      %v801 = vpop.f32.mrf.mxu0
      %v802 = vpop.f32.mrf.mxu0
      %v803 = vpop.f32.mrf.mxu0
      %804 = vdwg.mxu0
      %805 = vst [vmem:[#allocation11] sm:$0xff] %v800
    $region52: #{tpu_custom_call.1} parent=1 // pred_fallthru
      _
    // Predicated region
    $region53: #{tpu_custom_call.1} parent=1 // pred_check
      _
    $region54: #{tpu_custom_call.1} parent=1 // pred_check_branch
      %807 = sbr.rel (0) target = $region56
    $region55: #{tpu_custom_call.1} parent=1 // pred_region
      %s809 = ssub.s32 128, 128
      %810 = vsyncadd [#allocation7], %s809
      %s812 = sshll.u32 [#allocation11], 4
      %s813 = int_to_ptr.vmem [resolvable:$true] %s812
      %815 = dma.vmem_to_hbm [thread:$0]  %s813, 128, %s6, [#allocation7]
    $region56: #{tpu_custom_call.1} parent=1 // pred_fallthru
      _
    // Predicated region
    $region57: #{tpu_custom_call.1} parent=1 // pred_check
      _
    $region58: #{tpu_custom_call.1} parent=1 // pred_check_branch
      %817 = sbr.rel (0) target = $region60
    $region59: #{tpu_custom_call.1} parent=1 // pred_region
      %818 = dma.done [#allocation7], 128
    $region60: #{tpu_custom_call.1} parent=1 // pred_fallthru
      _
    %819 = vsyncpa [#allocation6], 1
    %820 = vsyncpa [#allocation9], 1
    %821 = vsyncpa [#allocation7], 1

</llo_original>
